<compile_context>
chip_gen: v7x
topology: tpu7x:2x2x1
jax: 0.10.0
libtpu: 0.0.40
codegen_flags: <defaults>
</compile_context>

<pallas_src>
import functools

import jax
import jax.numpy as jnp
from jax.experimental import pallas as pl
from jax.experimental.pallas import tpu as pltpu


def _ranker_kernel(vit_ref, inc_ref, res_ref, w1_ref, w2_ref, w3_ref, b_ref, o_ref):
    # Three accumulated MXU dots replace concat + single dot (no XLU concat,
    # no transposed-weight copy).  f32 accumulation regardless of input dtype.
    acc = jnp.dot(vit_ref[...], w1_ref[...], preferred_element_type=jnp.float32)
    acc = acc + jnp.dot(inc_ref[...], w2_ref[...], preferred_element_type=jnp.float32)
    acc = acc + jnp.dot(res_ref[...], w3_ref[...], preferred_element_type=jnp.float32)
    o_ref[...] = (acc + b_ref[...].astype(jnp.float32)).astype(o_ref.dtype)


@functools.partial(jax.jit, static_argnames=("tile_b", "use_bf16"))
def ranker_forward(vit_output, inc_v3_output, resnet_output, weight, bias,
                   *, tile_b=256, use_bf16=False):
    """Pallas equivalent of Ranker.forward.

    vit_output, inc_v3_output, resnet_output : [B, C]
    weight : [C, 3*C]   (nn.Linear layout: [out_features, in_features])
    bias   : [C]
    returns: [B, C] (same dtype as the activations)
    """
    B, C = vit_output.shape
    out_dtype = vit_output.dtype

    # Pre-transpose once in the wrapper (static weights -> effectively free)
    # and split into per-branch [C_in, C_out] slices.
    wt = weight.T                      # [3C, C]
    w1 = wt[0 * C:1 * C, :]
    w2 = wt[1 * C:2 * C, :]
    w3 = wt[2 * C:3 * C, :]
    bias2d = bias.reshape(1, C)

    if use_bf16:
        # bf16 operands, f32 accumulation (done inside the kernel).
        vit_output = vit_output.astype(jnp.bfloat16)
        inc_v3_output = inc_v3_output.astype(jnp.bfloat16)
        resnet_output = resnet_output.astype(jnp.bfloat16)
        w1, w2, w3 = (w.astype(jnp.bfloat16) for w in (w1, w2, w3))

    # --- batch tiling -------------------------------------------------------
    # Keep per-step VMEM (2x double-buffered activation tiles + resident
    # weights) well under v7x's 64 MiB VMEM.  256 is MXU-granular on v6e/v7x
    # and a multiple of 128 for v5e.  Small batches use a single full block
    # (block == full array dim satisfies the (8,128) rule).
    if B >= tile_b:
        tb = tile_b
    else:
        tb = B
    grid = (pl.cdiv(B, tb),)

    act_spec = pl.BlockSpec((tb, C), lambda i: (i, 0))       # streamed per tile
    w_spec = pl.BlockSpec((C, C), lambda i: (0, 0))          # resident (constant map)
    b_spec = pl.BlockSpec((1, C), lambda i: (0, 0))          # resident (constant map)
    out_spec = pl.BlockSpec((tb, C), lambda i: (i, 0))

    return pl.pallas_call(
        _ranker_kernel,
        out_shape=jax.ShapeDtypeStruct((B, C), out_dtype),
        grid_spec=pltpu.PrefetchScalarGridSpec(
            num_scalar_prefetch=0,
            grid=grid,
            in_specs=[act_spec, act_spec, act_spec, w_spec, w_spec, w_spec, b_spec],
            out_specs=out_spec,
        ),
        compiler_params=pltpu.CompilerParams(
            # Batch tiles are independent -> megacore sharding on v7x.
            dimension_semantics=("parallel",),
        ),
    )(vit_output, inc_v3_output, resnet_output, w1, w2, w3, bias2d)


if __name__ == "__main__":
    B = 2            # batch
    num_classes = 8  # C

    key = jax.random.PRNGKey(0)
    k_vit, k_inc, k_res, k_w, k_b = jax.random.split(key, 5)

    vit_output = jax.random.normal(k_vit, (B, num_classes), dtype=jnp.float32)
    inc_v3_output = jax.random.normal(k_inc, (B, num_classes), dtype=jnp.float32)
    resnet_output = jax.random.normal(k_res, (B, num_classes), dtype=jnp.float32)

    # Deterministic parameter init mimicking nn.Linear default: U(-1/sqrt(in), 1/sqrt(in))
    fan_in = 3 * num_classes
    bound = 1.0 / (fan_in ** 0.5)
    weight = jax.random.uniform(
        k_w, (num_classes, fan_in), minval=-bound, maxval=bound, dtype=jnp.float32
    )
    bias = jax.random.uniform(
        k_b, (num_classes,), minval=-bound, maxval=bound, dtype=jnp.float32
    )

    out = ranker_forward(vit_output, inc_v3_output, resnet_output, weight, bias)
    jax.block_until_ready(out)

    # Reference check in plain JAX (same math as the PyTorch forward).
    ref = jnp.concatenate(
        [vit_output, inc_v3_output, resnet_output], axis=1
    ) @ weight.T + bias
    assert out.shape == (B, num_classes)
    assert jnp.allclose(out, ref, atol=1e-5, rtol=1e-5), "mismatch vs reference"

    print("KERNEL_OK")
</pallas_src>

<mosaic_0001>
module attributes {stable_mosaic.version = 11 : i64} {
  func.func @_ranker_kernel(%arg0: i32, %arg1: memref<2x8xf32, #tpu.memory_space<vmem>>, %arg2: memref<2x8xf32, #tpu.memory_space<vmem>>, %arg3: memref<2x8xf32, #tpu.memory_space<vmem>>, %arg4: memref<8x8xf32, #tpu.memory_space<vmem>>, %arg5: memref<8x8xf32, #tpu.memory_space<vmem>>, %arg6: memref<8x8xf32, #tpu.memory_space<vmem>>, %arg7: memref<1x8xf32, #tpu.memory_space<vmem>>, %arg8: memref<2x8xf32, #tpu.memory_space<vmem>>) attributes {dimension_semantics = [#tpu.dimension_semantics<parallel>], iteration_bounds = array<i64: 1>, scalar_prefetch = 0 : i64, scratch_operands = 0 : i64, tpu.core_type = #tpu.core_type<tc>, window_params = [{transform_indices = @transform_0, window_bounds = array<i64: 2, 8>}, {transform_indices = @transform_1, window_bounds = array<i64: 2, 8>}, {transform_indices = @transform_2, window_bounds = array<i64: 2, 8>}, {pipeline_mode = #tpu.pipeline_mode<synchronous>, transform_indices = @transform_3, window_bounds = array<i64: 8, 8>}, {pipeline_mode = #tpu.pipeline_mode<synchronous>, transform_indices = @transform_4, window_bounds = array<i64: 8, 8>}, {pipeline_mode = #tpu.pipeline_mode<synchronous>, transform_indices = @transform_5, window_bounds = array<i64: 8, 8>}, {pipeline_mode = #tpu.pipeline_mode<synchronous>, transform_indices = @transform_6, window_bounds = array<i64: 1, 8>}, {transform_indices = @transform_7, window_bounds = array<i64: 2, 8>}]} {
    %c0 = arith.constant 0 : index
    %c0_0 = arith.constant 0 : index
    %0 = vector.load %arg1[%c0, %c0_0] : memref<2x8xf32, #tpu.memory_space<vmem>>, vector<2x8xf32>
    %c0_1 = arith.constant 0 : index
    %c0_2 = arith.constant 0 : index
    %1 = vector.load %arg4[%c0_1, %c0_2] : memref<8x8xf32, #tpu.memory_space<vmem>>, vector<8x8xf32>
    %cst = arith.constant dense<0.000000e+00> : vector<2x8xf32>
    %2 = tpu.matmul %0, %1, %cst {dimension_numbers = #tpu.dot_dimension_numbers<[1], [0], [0], [1], [0, 0, 1, 1], [], []>} : vector<2x8xf32>, vector<8x8xf32>, vector<2x8xf32> -> vector<2x8xf32>
    %c0_3 = arith.constant 0 : index
    %c0_4 = arith.constant 0 : index
    %3 = vector.load %arg2[%c0_3, %c0_4] : memref<2x8xf32, #tpu.memory_space<vmem>>, vector<2x8xf32>
    %c0_5 = arith.constant 0 : index
    %c0_6 = arith.constant 0 : index
    %4 = vector.load %arg5[%c0_5, %c0_6] : memref<8x8xf32, #tpu.memory_space<vmem>>, vector<8x8xf32>
    %cst_7 = arith.constant dense<0.000000e+00> : vector<2x8xf32>
    %5 = tpu.matmul %3, %4, %cst_7 {dimension_numbers = #tpu.dot_dimension_numbers<[1], [0], [0], [1], [0, 0, 1, 1], [], []>} : vector<2x8xf32>, vector<8x8xf32>, vector<2x8xf32> -> vector<2x8xf32>
    %6 = arith.addf %2, %5 : vector<2x8xf32>
    %c0_8 = arith.constant 0 : index
    %c0_9 = arith.constant 0 : index
    %7 = vector.load %arg3[%c0_8, %c0_9] : memref<2x8xf32, #tpu.memory_space<vmem>>, vector<2x8xf32>
    %c0_10 = arith.constant 0 : index
    %c0_11 = arith.constant 0 : index
    %8 = vector.load %arg6[%c0_10, %c0_11] : memref<8x8xf32, #tpu.memory_space<vmem>>, vector<8x8xf32>
    %cst_12 = arith.constant dense<0.000000e+00> : vector<2x8xf32>
    %9 = tpu.matmul %7, %8, %cst_12 {dimension_numbers = #tpu.dot_dimension_numbers<[1], [0], [0], [1], [0, 0, 1, 1], [], []>} : vector<2x8xf32>, vector<8x8xf32>, vector<2x8xf32> -> vector<2x8xf32>
    %10 = arith.addf %6, %9 : vector<2x8xf32>
    %c0_13 = arith.constant 0 : index
    %c0_14 = arith.constant 0 : index
    %11 = vector.load %arg7[%c0_13, %c0_14] : memref<1x8xf32, #tpu.memory_space<vmem>>, vector<1x8xf32>
    %12 = vector.broadcast %11 : vector<1x8xf32> to vector<2x8xf32>
    %13 = arith.addf %10, %12 : vector<2x8xf32>
    %c0_15 = arith.constant 0 : index
    %c0_16 = arith.constant 0 : index
    %14 = vector.load %arg8[%c0_15, %c0_16] : memref<2x8xf32, #tpu.memory_space<vmem>>, vector<2x8xf32>
    tpu.vector_store %arg8[%c0_15, %c0_16], %13 {strides = array<i32>} : memref<2x8xf32, #tpu.memory_space<vmem>>, vector<2x8xf32>,
    return
  }
  func.func @transform_0(%arg0: i32) -> (i32, i32) {
    %c0_i32 = arith.constant 0 : i32
    %c0_i32_0 = arith.constant 0 : i32
    return %arg0, %c0_i32 : i32, i32
  }
  func.func @transform_1(%arg0: i32) -> (i32, i32) {
    %c0_i32 = arith.constant 0 : i32
    %c0_i32_0 = arith.constant 0 : i32
    return %arg0, %c0_i32 : i32, i32
  }
  func.func @transform_2(%arg0: i32) -> (i32, i32) {
    %c0_i32 = arith.constant 0 : i32
    %c0_i32_0 = arith.constant 0 : i32
    return %arg0, %c0_i32 : i32, i32
  }
  func.func @transform_3(%arg0: i32) -> (i32, i32) {
    %c0_i32 = arith.constant 0 : i32
    %c0_i32_0 = arith.constant 0 : i32
    %c0_i32_1 = arith.constant 0 : i32
    return %c0_i32, %c0_i32_0 : i32, i32
  }
  func.func @transform_4(%arg0: i32) -> (i32, i32) {
    %c0_i32 = arith.constant 0 : i32
    %c0_i32_0 = arith.constant 0 : i32
    %c0_i32_1 = arith.constant 0 : i32
    return %c0_i32, %c0_i32_0 : i32, i32
  }
  func.func @transform_5(%arg0: i32) -> (i32, i32) {
    %c0_i32 = arith.constant 0 : i32
    %c0_i32_0 = arith.constant 0 : i32
    %c0_i32_1 = arith.constant 0 : i32
    return %c0_i32, %c0_i32_0 : i32, i32
  }
  func.func @transform_6(%arg0: i32) -> (i32, i32) {
    %c0_i32 = arith.constant 0 : i32
    %c0_i32_0 = arith.constant 0 : i32
    %c0_i32_1 = arith.constant 0 : i32
    return %c0_i32, %c0_i32_0 : i32, i32
  }
  func.func @transform_7(%arg0: i32) -> (i32, i32) {
    %c0_i32 = arith.constant 0 : i32
    %c0_i32_0 = arith.constant 0 : i32
    return %arg0, %c0_i32 : i32, i32
  }
}

</mosaic_0001>

<llo_original>
// kernel: ranker_forward.1
$region0: #{ranker_forward.1}
  #allocation0 [shape = 'u32[]', space=smem, size = 0x4, offset = 0x4, fixed_abs, tag = 'smem constant byte address 0x4 - core index']
  #allocation1 [shape = 'u32[144,128]{1,0:T(1,128)}', space=vmem, size = 0x12000, scoped, tag = 'internal scratch']
  %s0 = inlined_call_operand.vmem [shape: f32[2,8], index: 0, kind: input, shape index: {}]
  %s1 = inlined_call_operand.vmem [shape: f32[2,8], index: 1, kind: input, shape index: {}]
  %s2 = inlined_call_operand.vmem [shape: f32[2,8], index: 2, kind: input, shape index: {}]
  %s3 = inlined_call_operand.vmem [shape: f32[8,8], index: 3, kind: input, shape index: {}]
  %s4 = inlined_call_operand.vmem [shape: f32[8,8], index: 4, kind: input, shape index: {}]
  %s5 = inlined_call_operand.vmem [shape: f32[8,8], index: 5, kind: input, shape index: {}]
  %s6 = inlined_call_operand.vmem [shape: f32[1,8], index: 6, kind: input, shape index: {}]
  %s7 = inlined_call_operand.hbm [shape: f32[2,8], index: 7, kind: output, shape index: {}]
  %s8 = sld [smem:[#allocation0]]
  $region38: #{ranker_forward.1} parent=0
    _
  %s10 = ssub.s32 1, %s8
  %s11 = scalar_select 0, %s10, %s8
  $region1: #{ranker_forward.1} parent=0
    #allocation2 [shape = 'u8[1024]{0}', space=vmem, size = 0x400, scoped, tag = 'output window, operand 0, single buffered']
    #allocation3 [shape = 's32[1]{0}', space=sflag, size = 0x4, scoped, tag = 'scoped memory for ranker_forward.1']
    %12 = vsyncpa [#allocation3], 0
    // Predicated region
    $region2: #{ranker_forward.1} parent=1 // pred_check
      _
    $region3: #{ranker_forward.1} parent=1 // pred_check_branch
      %14 = sbr.rel (0) target = $region5
    $region4: #{ranker_forward.1} parent=1 // pred_region
      _
    $region5: #{ranker_forward.1} parent=1 // pred_fallthru
      _
    // Predicated region
    $region6: #{ranker_forward.1} parent=1 // pred_check
      _
    $region7: #{ranker_forward.1} parent=1 // pred_check_branch
      %16 = sbr.rel (0) target = $region9
    $region8: #{ranker_forward.1} parent=1 // pred_region
      _
    $region9: #{ranker_forward.1} parent=1 // pred_fallthru
      _
    // Predicated region
    $region10: #{ranker_forward.1} parent=1 // pred_check
      _
    $region11: #{ranker_forward.1} parent=1 // pred_check_branch
      %18 = sbr.rel (0) target = $region13
    $region12: #{ranker_forward.1} parent=1 // pred_region
      _
    $region13: #{ranker_forward.1} parent=1 // pred_fallthru
      _
    // Predicated region
    $region14: #{ranker_forward.1} parent=1 // pred_check
      _
    $region15: #{ranker_forward.1} parent=1 // pred_check_branch
      %20 = sbr.rel (0) target = $region17
    $region16: #{ranker_forward.1} parent=1 // pred_region
      _
    $region17: #{ranker_forward.1} parent=1 // pred_fallthru
      _
    // Predicated region
    $region18: #{ranker_forward.1} parent=1 // pred_check
      _
    $region19: #{ranker_forward.1} parent=1 // pred_check_branch
      %22 = sbr.rel (0) target = $region21
    $region20: #{ranker_forward.1} parent=1 // pred_region
      _
    $region21: #{ranker_forward.1} parent=1 // pred_fallthru
      _
    // Predicated region
    $region22: #{ranker_forward.1} parent=1 // pred_check
      _
    $region23: #{ranker_forward.1} parent=1 // pred_check_branch
      %24 = sbr.rel (0) target = $region25
    $region24: #{ranker_forward.1} parent=1 // pred_region
      _
    $region25: #{ranker_forward.1} parent=1 // pred_fallthru
      _
    // Predicated region
    $region26: #{ranker_forward.1} parent=1 // pred_check
      _
    $region27: #{ranker_forward.1} parent=1 // pred_check_branch
      %26 = sbr.rel (0) target = $region29
    $region28: #{ranker_forward.1} parent=1 // pred_region
      _
    $region29: #{ranker_forward.1} parent=1 // pred_fallthru
      _
    %v27 = vld [vmem:[%s0] sm:$0x3]
    %v28 = vld [vmem:[%s3] sm:$0xff]
    %v29 = vld [vmem:[%s1] sm:$0x3]
    %v30 = vld [vmem:[%s4] sm:$0xff]
    %vm31 = vcmask 64512
    %v33 = vsel %vm31, %v29, 0
    %35 = vmatprep.subr.mxu0 0.0
    %36 = vmatpush1.msra.mxu0 %v30
    %37 = vmatprep.subr.mxu0 0.0
    %38 = vmatpush1.msra.mxu0 0.0
    %39 = vmatprep.subr.mxu0 0.0
    %40 = vmatpush1.msra.mxu0 0.0
    %41 = vmatprep.subr.mxu0 0.0
    %42 = vmatpush1.msra.mxu0 0.0
    %43 = vmatprep.subr.mxu0 0.0
    %44 = vmatpush1.msra.mxu0 0.0
    %45 = vmatprep.subr.mxu0 0.0
    %46 = vmatpush1.msra.mxu0 0.0
    %47 = vmatprep.subr.mxu0 0.0
    %48 = vmatpush1.msra.mxu0 0.0
    %49 = vmatprep.subr.mxu0 0.0
    %50 = vmatpush1.msra.mxu0 0.0
    %51 = vmatprep.subr.mxu0 0.0
    %52 = vmatpush1.msra.mxu0 0.0
    %53 = vmatprep.subr.mxu0 0.0
    %54 = vmatpush1.msra.mxu0 0.0
    %55 = vmatprep.subr.mxu0 0.0
    %56 = vmatpush1.msra.mxu0 0.0
    %57 = vmatprep.subr.mxu0 0.0
    %58 = vmatpush1.msra.mxu0 0.0
    %59 = vmatprep.subr.mxu0 0.0
    %60 = vmatpush1.msra.mxu0 0.0
    %61 = vmatprep.subr.mxu0 0.0
    %62 = vmatpush1.msra.mxu0 0.0
    %63 = vmatprep.subr.mxu0 0.0
    %64 = vmatpush1.msra.mxu0 0.0
    %65 = vmatprep.subr.mxu0 0.0
    %66 = vmatpush1.msra.mxu0 0.0
    %67 = vmatprep.subr.mxu0 0.0
    %68 = vmatpush1.msra.mxu0 0.0
    %69 = vmatprep.subr.mxu0 0.0
    %70 = vmatpush1.msra.mxu0 0.0
    %71 = vmatprep.subr.mxu0 0.0
    %72 = vmatpush1.msra.mxu0 0.0
    %73 = vmatprep.subr.mxu0 0.0
    %74 = vmatpush1.msra.mxu0 0.0
    %75 = vmatprep.subr.mxu0 0.0
    %76 = vmatpush1.msra.mxu0 0.0
    %77 = vmatprep.subr.mxu0 0.0
    %78 = vmatpush1.msra.mxu0 0.0
    %79 = vmatprep.subr.mxu0 0.0
    %80 = vmatpush1.msra.mxu0 0.0
    %81 = vmatprep.subr.mxu0 0.0
    %82 = vmatpush1.msra.mxu0 0.0
    %83 = vmatprep.subr.mxu0 0.0
    %84 = vmatpush1.msra.mxu0 0.0
    %85 = vmatprep.subr.mxu0 0.0
    %86 = vmatpush1.msra.mxu0 0.0
    %87 = vmatprep.subr.mxu0 0.0
    %88 = vmatpush1.msra.mxu0 0.0
    %89 = vmatprep.subr.mxu0 0.0
    %90 = vmatpush1.msra.mxu0 0.0
    %91 = vmatprep.subr.mxu0 0.0
    %92 = vmatpush1.msra.mxu0 0.0
    %93 = vmatprep.subr.mxu0 0.0
    %94 = vmatpush1.msra.mxu0 0.0
    %95 = vmatprep.subr.mxu0 0.0
    %96 = vmatpush1.msra.mxu0 0.0
    %97 = vmatprep.subr.mxu0 0.0
    %98 = vmatpush1.msra.mxu0 0.0
    %99 = vmatprep.mubr.f32.mxu0 0.0
    %100 = vmatmul.mubr.f32.gmra.mrb[0].mxu0 %v33
    %v101 = vpop.f32.mrb[0].mxu0
    %v102 = vadd.f32 0.0, %v101
    %v103 = vpop.f32.mrb[0].mxu0
    %104 = vdwg.mxu0
    %v106 = vsel %vm31, %v27, 0
    %108 = vmatprep.subr.mxu0 0.0
    %109 = vmatpush1.msra.mxu0 %v28
    %110 = vmatprep.subr.mxu0 0.0
    %111 = vmatpush1.msra.mxu0 0.0
    %112 = vmatprep.subr.mxu0 0.0
    %113 = vmatpush1.msra.mxu0 0.0
    %114 = vmatprep.subr.mxu0 0.0
    %115 = vmatpush1.msra.mxu0 0.0
    %116 = vmatprep.subr.mxu0 0.0
    %117 = vmatpush1.msra.mxu0 0.0
    %118 = vmatprep.subr.mxu0 0.0
    %119 = vmatpush1.msra.mxu0 0.0
    %120 = vmatprep.subr.mxu0 0.0
    %121 = vmatpush1.msra.mxu0 0.0
    %122 = vmatprep.subr.mxu0 0.0
    %123 = vmatpush1.msra.mxu0 0.0
    %124 = vmatprep.subr.mxu0 0.0
    %125 = vmatpush1.msra.mxu0 0.0
    %126 = vmatprep.subr.mxu0 0.0
    %127 = vmatpush1.msra.mxu0 0.0
    %128 = vmatprep.subr.mxu0 0.0
    %129 = vmatpush1.msra.mxu0 0.0
    %130 = vmatprep.subr.mxu0 0.0
    %131 = vmatpush1.msra.mxu0 0.0
    %132 = vmatprep.subr.mxu0 0.0
    %133 = vmatpush1.msra.mxu0 0.0
    %134 = vmatprep.subr.mxu0 0.0
    %135 = vmatpush1.msra.mxu0 0.0
    %136 = vmatprep.subr.mxu0 0.0
    %137 = vmatpush1.msra.mxu0 0.0
    %138 = vmatprep.subr.mxu0 0.0
    %139 = vmatpush1.msra.mxu0 0.0
    %140 = vmatprep.subr.mxu0 0.0
    %141 = vmatpush1.msra.mxu0 0.0
    %142 = vmatprep.subr.mxu0 0.0
    %143 = vmatpush1.msra.mxu0 0.0
    %144 = vmatprep.subr.mxu0 0.0
    %145 = vmatpush1.msra.mxu0 0.0
    %146 = vmatprep.subr.mxu0 0.0
    %147 = vmatpush1.msra.mxu0 0.0
    %148 = vmatprep.subr.mxu0 0.0
    %149 = vmatpush1.msra.mxu0 0.0
    %150 = vmatprep.subr.mxu0 0.0
    %151 = vmatpush1.msra.mxu0 0.0
    %152 = vmatprep.subr.mxu0 0.0
    %153 = vmatpush1.msra.mxu0 0.0
    %154 = vmatprep.subr.mxu0 0.0
    %155 = vmatpush1.msra.mxu0 0.0
    %156 = vmatprep.subr.mxu0 0.0
    %157 = vmatpush1.msra.mxu0 0.0
    %158 = vmatprep.subr.mxu0 0.0
    %159 = vmatpush1.msra.mxu0 0.0
    %160 = vmatprep.subr.mxu0 0.0
    %161 = vmatpush1.msra.mxu0 0.0
    %162 = vmatprep.subr.mxu0 0.0
    %163 = vmatpush1.msra.mxu0 0.0
    %164 = vmatprep.subr.mxu0 0.0
    %165 = vmatpush1.msra.mxu0 0.0
    %166 = vmatprep.subr.mxu0 0.0
    %167 = vmatpush1.msra.mxu0 0.0
    %168 = vmatprep.subr.mxu0 0.0
    %169 = vmatpush1.msra.mxu0 0.0
    %170 = vmatprep.subr.mxu0 0.0
    %171 = vmatpush1.msra.mxu0 0.0
    %172 = vmatprep.mubr.f32.mxu0 0.0
    %173 = vmatmul.mubr.f32.gmra.mrb[0].mxu0 %v106
    %v174 = vpop.f32.mrb[0].mxu0
    %v175 = vadd.f32 %v102, %v174
    %v176 = vpop.f32.mrb[0].mxu0
    %177 = vdwg.mxu0
    %v178 = vld [vmem:[%s2] sm:$0x3]
    %v179 = vld [vmem:[%s5] sm:$0xff]
    %v181 = vsel %vm31, %v178, 0
    %183 = vmatprep.subr.mxu0 0.0
    %184 = vmatpush1.msra.mxu0 %v179
    %185 = vmatprep.subr.mxu0 0.0
    %186 = vmatpush1.msra.mxu0 0.0
    %187 = vmatprep.subr.mxu0 0.0
    %188 = vmatpush1.msra.mxu0 0.0
    %189 = vmatprep.subr.mxu0 0.0
    %190 = vmatpush1.msra.mxu0 0.0
    %191 = vmatprep.subr.mxu0 0.0
    %192 = vmatpush1.msra.mxu0 0.0
    %193 = vmatprep.subr.mxu0 0.0
    %194 = vmatpush1.msra.mxu0 0.0
    %195 = vmatprep.subr.mxu0 0.0
    %196 = vmatpush1.msra.mxu0 0.0
    %197 = vmatprep.subr.mxu0 0.0
    %198 = vmatpush1.msra.mxu0 0.0
    %199 = vmatprep.subr.mxu0 0.0
    %200 = vmatpush1.msra.mxu0 0.0
    %201 = vmatprep.subr.mxu0 0.0
    %202 = vmatpush1.msra.mxu0 0.0
    %203 = vmatprep.subr.mxu0 0.0
    %204 = vmatpush1.msra.mxu0 0.0
    %205 = vmatprep.subr.mxu0 0.0
    %206 = vmatpush1.msra.mxu0 0.0
    %207 = vmatprep.subr.mxu0 0.0
    %208 = vmatpush1.msra.mxu0 0.0
    %209 = vmatprep.subr.mxu0 0.0
    %210 = vmatpush1.msra.mxu0 0.0
    %211 = vmatprep.subr.mxu0 0.0
    %212 = vmatpush1.msra.mxu0 0.0
    %213 = vmatprep.subr.mxu0 0.0
    %214 = vmatpush1.msra.mxu0 0.0
    %215 = vmatprep.subr.mxu0 0.0
    %216 = vmatpush1.msra.mxu0 0.0
    %217 = vmatprep.subr.mxu0 0.0
    %218 = vmatpush1.msra.mxu0 0.0
    %219 = vmatprep.subr.mxu0 0.0
    %220 = vmatpush1.msra.mxu0 0.0
    %221 = vmatprep.subr.mxu0 0.0
    %222 = vmatpush1.msra.mxu0 0.0
    %223 = vmatprep.subr.mxu0 0.0
    %224 = vmatpush1.msra.mxu0 0.0
    %225 = vmatprep.subr.mxu0 0.0
    %226 = vmatpush1.msra.mxu0 0.0
    %227 = vmatprep.subr.mxu0 0.0
    %228 = vmatpush1.msra.mxu0 0.0
    %229 = vmatprep.subr.mxu0 0.0
    %230 = vmatpush1.msra.mxu0 0.0
    %231 = vmatprep.subr.mxu0 0.0
    %232 = vmatpush1.msra.mxu0 0.0
    %233 = vmatprep.subr.mxu0 0.0
    %234 = vmatpush1.msra.mxu0 0.0
    %235 = vmatprep.subr.mxu0 0.0
    %236 = vmatpush1.msra.mxu0 0.0
    %237 = vmatprep.subr.mxu0 0.0
    %238 = vmatpush1.msra.mxu0 0.0
    %239 = vmatprep.subr.mxu0 0.0
    %240 = vmatpush1.msra.mxu0 0.0
    %241 = vmatprep.subr.mxu0 0.0
    %242 = vmatpush1.msra.mxu0 0.0
    %243 = vmatprep.subr.mxu0 0.0
    %244 = vmatpush1.msra.mxu0 0.0
    %245 = vmatprep.subr.mxu0 0.0
    %246 = vmatpush1.msra.mxu0 0.0
    %247 = vmatprep.mubr.f32.mxu0 0.0
    %248 = vmatmul.mubr.f32.gmra.mrb[0].mxu0 %v181
    %v249 = vpop.f32.mrb[0].mxu0
    %v250 = vadd.f32 0.0, %v249
    %v251 = vpop.f32.mrb[0].mxu0
    %252 = vdwg.mxu0
    %v253 = vadd.f32 %v175, %v250
    %v254 = vld [vmem:[%s6] sm:$0x1]
    %v256 = vlaneseq
    %v257 = vshrl.u32 %v256, 7
    %v258 = vsub.s32 0, %v257
    %v259 = vrot.slane %v254, %v258
    %v261 = vadd.f32 %v253, %v259
    %vm262 = vcmask 58368
    %263 = vst.msk [vmem:[#allocation2] sm:$0x3] %vm262, %v261
    // Predicated region
    $region30: #{ranker_forward.1} parent=1 // pred_check
      _
    $region31: #{ranker_forward.1} parent=1 // pred_check_branch
      %265 = sbr.rel (0) target = $region33
    $region32: #{ranker_forward.1} parent=1 // pred_region
      %s267 = ssub.s32 32, 32
      %268 = vsyncadd [#allocation3], %s267
      %s270 = sshll.u32 [#allocation2], 4
      %s271 = int_to_ptr.vmem [resolvable:$true] %s270
      %273 = dma.vmem_to_hbm [thread:$0]  %s271, 32, %s7, [#allocation3]
    $region33: #{ranker_forward.1} parent=1 // pred_fallthru
      _
    // Predicated region
    $region34: #{ranker_forward.1} parent=1 // pred_check
      _
    $region35: #{ranker_forward.1} parent=1 // pred_check_branch
      %275 = sbr.rel (0) target = $region37
    $region36: #{ranker_forward.1} parent=1 // pred_region
      %276 = dma.done [#allocation3], 32
    $region37: #{ranker_forward.1} parent=1 // pred_fallthru
      _
    %277 = vsyncpa [#allocation3], 1

</llo_original>
